<compile_context>
chip_gen: v6e
topology: v6e:2x2x1
jax: 0.10.0
libtpu: 0.0.40
codegen_flags: <defaults>
</compile_context>

<pallas_src>
import functools

import jax
import jax.numpy as jnp
from jax import lax
from jax.experimental import pallas as pl
from jax.experimental.pallas import tpu as pltpu

_LANES = 128
_SUBLANES = 8
_ALIGN_ELEMS = _SUBLANES * _LANES          # 1024: kernel handles this-aligned prefix
_TARGET_BLOCK_BYTES = 2 * 1024 * 1024      # ~2 MiB of HBM traffic per input block
_MAX_BLOCK_ROWS = 8192                     # cap (keeps f32 intermediates modest)


def _charbonnier_kernel(ip_ref, tgt_ref, o_ref, acc_ref, *,
                        eps2, rows, block_rows, n_inner, n_full_tiles,
                        need_mask):
    """Grid = (outer parallel partitions, inner reduction steps).

    ip_ref/tgt_ref : VMEM (block_rows, 128) native-dtype tiles
    o_ref          : SMEM (1, 1) f32 partial sum for this outer partition
    acc_ref        : VMEM (8, 128) f32 vector accumulator (scratch, 4 vregs)
    """
    o = pl.program_id(0)          # parallel axis (per-TensorCore partial sums)
    i = pl.program_id(1)          # reduction axis

    @pl.when(i == 0)
    def _():
        acc_ref[...] = jnp.zeros_like(acc_ref)

    d = ip_ref[...].astype(jnp.float32) - tgt_ref[...].astype(jnp.float32)
    val = jnp.sqrt(d * d + eps2)   # sqrt -> EUP slot (free vs. VPU/DMA)

    def accumulate(v):
        # Fold the (block_rows, 128) tile into the tiny (8, 128) accumulator:
        # same-lane, cross-vreg adds stay on the VPU; only ~1 VMEM load + 1
        # store of the accumulator per grid step (vs. a full-tile RMW before).
        acc_ref[...] += v.reshape(-1, _SUBLANES, _LANES).sum(axis=0)

    if need_mask:
        tile_idx = o * n_inner + i          # linear (virtual) row-tile index

        @pl.when(tile_idx < n_full_tiles)   # fully-valid tiles: no masking
        def _():
            accumulate(val)

        @pl.when(tile_idx >= n_full_tiles)
        def _():
            # Partial last tile and/or duplicated overhang tile of the forced
            # 2-way outer split: mask by global row index (row count stays far
            # below int32 range for any realistic input size).
            row = lax.broadcasted_iota(jnp.int32, val.shape, 0)
            valid = (tile_idx * block_rows + row) < rows
            accumulate(jnp.where(valid, val, jnp.float32(0.0)))
    else:
        accumulate(val)

    @pl.when(i == n_inner - 1)
    def _():
        # Single cross-lane/sublane reduce per outer partition.
        o_ref[0, 0] = jnp.sum(acc_ref[...])


def charbonnier_loss(ip, target, eps=0.001):
    """Pallas implementation of Loss_fn.forward. Returns a scalar f32."""
    assert ip.shape == target.shape
    n_elems = int(ip.size)
    eps2 = float(eps) * float(eps)
    f32 = jnp.float32

    ip_f = ip.reshape(-1)
    tgt_f = target.reshape(-1)

    # Kernel consumes the (8*128)-aligned prefix; the <1024-element ragged
    # sliver (if any) is summed with plain jnp.  No jnp.pad: for the common
    # NCHW case (n_elems % 1024 == 0) the reshape below is a free bitcast and
    # the sliver branch disappears entirely.
    n_aligned = (n_elems // _ALIGN_ELEMS) * _ALIGN_ELEMS
    sliver = n_elems - n_aligned

    total = jnp.zeros((), f32)
    if sliver:
        ds = ip_f[n_aligned:].astype(f32) - tgt_f[n_aligned:].astype(f32)
        total = jnp.sum(jnp.sqrt(ds * ds + eps2))

    if n_aligned == 0:
        # Input smaller than one (8,128) tile: plain jnp already covered it.
        return total / f32(n_elems)

    rows = n_aligned // _LANES              # multiple of 8 by construction
    ip2 = ip_f[:n_aligned].reshape(rows, _LANES)
    tgt2 = tgt_f[:n_aligned].reshape(rows, _LANES)

    # Block size: ~2 MiB of HBM traffic per input block (dtype-scaled) so the
    # ~0.35 us per-grid-step overhead stays small even at v7x HBM speed.
    itemsize = jnp.dtype(ip.dtype).itemsize
    max_rows = _TARGET_BLOCK_BYTES // (_LANES * itemsize)
    max_rows = min(_MAX_BLOCK_ROWS,
                   max(_SUBLANES, (max_rows // _SUBLANES) * _SUBLANES))
    if rows <= max_rows:
        block_rows = rows                   # single block == full array dims
        n_tiles = 1
    else:
        block_rows = max_rows               # multiple of 8 -> legal tiling
        n_tiles = pl.cdiv(rows, block_rows)

    # Split into 2 outer "parallel" partitions whenever there is more than one
    # tile (even for odd tile counts) so both v7x TensorCores get work; the
    # duplicated overhang tile is masked to zero in-kernel.  Harmless on the
    # single-TC v5e/v6e.
    n_outer = 2 if n_tiles >= 2 else 1
    n_inner = pl.cdiv(n_tiles, n_outer)

    n_full_tiles = rows // block_rows           # tiles needing no masking
    need_mask = (n_outer * n_inner) > n_full_tiles

    kernel = functools.partial(
        _charbonnier_kernel,
        eps2=eps2, rows=rows, block_rows=block_rows, n_inner=n_inner,
        n_full_tiles=n_full_tiles, need_mask=need_mask,
    )

    def idx_map(o, i, n_inner=n_inner, last=n_tiles - 1):
        # Clamp so the duplicated overhang tile of the 2-way split re-reads the
        # last real tile (its contribution is masked to zero in the kernel).
        return (jnp.minimum(o * n_inner + i, last), 0)

    # Triple-buffer the streamed inputs when there is a real inner pipeline:
    # 2 inputs x 3 buffers x <=2 MiB stays well inside the 32 MiB scoped VMEM
    # (incl. v7x's 64 MiB physical).  Default double-buffering otherwise.
    spec_kwargs = {"pipeline_mode": pl.Buffered(3)} if n_inner >= 2 else {}
    in_spec = pl.BlockSpec((block_rows, _LANES), idx_map, **spec_kwargs)

    in_bytes = 2 * n_aligned * itemsize
    cost = pl.CostEstimate(
        flops=4 * n_aligned,          # sub, mul, add eps^2, accumulate
        transcendentals=n_aligned,    # sqrt
        bytes_accessed=int(in_bytes) + 4 * n_outer,
    )

    partials = pl.pallas_call(
        kernel,
        out_shape=jax.ShapeDtypeStruct((n_outer, 1), f32),
        grid_spec=pltpu.PrefetchScalarGridSpec(
            num_scalar_prefetch=0,
            grid=(n_outer, n_inner),
            in_specs=[in_spec, in_spec],
            out_specs=pl.BlockSpec((1, 1), lambda o, i: (o, 0),
                                   memory_space=pltpu.SMEM),
            scratch_shapes=[pltpu.VMEM((_SUBLANES, _LANES), jnp.float32)],
        ),
        compiler_params=pltpu.CompilerParams(
            dimension_semantics=("parallel", "arbitrary"),
            # Explicit limit (v5e scoped default is only 16 MiB); blocks +
            # buffers + elementwise intermediates stay comfortably under it.
            vmem_limit_bytes=32 * 1024 * 1024,
        ),
        cost_estimate=cost,
    )(ip2, tgt2)

    total = total + jnp.sum(partials)
    return total / f32(n_elems)


if __name__ == "__main__":
    eps = 0.001

    def ref_loss(a, b):
        d = a.astype(jnp.float32) - b.astype(jnp.float32)
        return jnp.mean(jnp.sqrt(d * d + eps * eps))

    key = jax.random.PRNGKey(0)
    k1, k2, k3, k4 = jax.random.split(key, 4)

    # 1) Module-scale NCHW demo: batch=2, channels=4, spatial=16x16.
    ip = jax.random.normal(k1, (2, 4, 16, 16), dtype=jnp.float32)
    target = jax.random.normal(k2, (2, 4, 16, 16), dtype=jnp.float32)
    loss = jax.block_until_ready(charbonnier_loss(ip, target, eps=eps))
    ref = ref_loss(ip, target)
    assert jnp.allclose(loss, ref, rtol=1e-5, atol=1e-6), (loss, ref)

    # 2) Larger f32 image pair: exercises the tiled path, the forced 2-way
    #    parallel split with an odd tile count (masked overhang tile), the
    #    partial last tile, the non-128-multiple sliver path and Buffered(3).
    a = jax.random.normal(k3, (1, 3, 770, 544), dtype=jnp.float32)
    b = jax.random.normal(k4, (1, 3, 770, 544), dtype=jnp.float32)
    loss2 = jax.block_until_ready(charbonnier_loss(a, b, eps=eps))
    ref2 = ref_loss(a, b)
    assert jnp.allclose(loss2, ref2, rtol=1e-4, atol=1e-6), (loss2, ref2)

    # 3) bf16 inputs: exercises the dtype-scaled block size + in-kernel upcast.
    a16 = a.astype(jnp.bfloat16)
    b16 = b.astype(jnp.bfloat16)
    loss3 = jax.block_until_ready(charbonnier_loss(a16, b16, eps=eps))
    ref3 = ref_loss(a16, b16)
    assert jnp.allclose(loss3, ref3, rtol=1e-4, atol=1e-6), (loss3, ref3)

    print("KERNEL_OK")
</pallas_src>

<mosaic_0001>
module attributes {stable_mosaic.version = 11 : i64} {
  func.func @_charbonnier_kernel(%arg0: i32, %arg1: i32, %arg2: memref<16x128xf32, #tpu.memory_space<vmem>>, %arg3: memref<16x128xf32, #tpu.memory_space<vmem>>, %arg4: memref<1x1xf32, #tpu.memory_space<smem>>, %arg5: memref<8x128xf32, #tpu.memory_space<vmem>>) attributes {dimension_semantics = [#tpu.dimension_semantics<parallel>, #tpu.dimension_semantics<arbitrary>], iteration_bounds = array<i64: 1, 1>, scalar_prefetch = 0 : i64, scratch_operands = 1 : i64, tpu.core_type = #tpu.core_type<tc>, window_params = [{transform_indices = @transform_0, window_bounds = array<i64: 16, 128>}, {transform_indices = @transform_1, window_bounds = array<i64: 16, 128>}, {transform_indices = @transform_2, window_bounds = array<i64: 1, 1>}]} {
    %c0_i32 = arith.constant 0 : i32
    %0 = arith.cmpi eq, %arg1, %c0_i32 : i32
    %1 = arith.extui %0 : i1 to i32
    %c0_i32_0 = arith.constant 0 : i32
    %2 = arith.cmpi ne, %1, %c0_i32_0 : i32
    scf.if %2 {
      %cst_11 = arith.constant 0.000000e+00 : f32
      %18 = vector.broadcast %cst_11 : f32 to vector<8x128xf32>
      %c0_12 = arith.constant 0 : index
      %c0_13 = arith.constant 0 : index
      %19 = vector.load %arg5[%c0_12, %c0_13] : memref<8x128xf32, #tpu.memory_space<vmem>>, vector<8x128xf32>
      tpu.vector_store %arg5[%c0_12, %c0_13], %18 {strides = array<i32>} : memref<8x128xf32, #tpu.memory_space<vmem>>, vector<8x128xf32>,
    } else {
    }
    %c0 = arith.constant 0 : index
    %c0_1 = arith.constant 0 : index
    %3 = vector.load %arg2[%c0, %c0_1] : memref<16x128xf32, #tpu.memory_space<vmem>>, vector<16x128xf32>
    %c0_2 = arith.constant 0 : index
    %c0_3 = arith.constant 0 : index
    %4 = vector.load %arg3[%c0_2, %c0_3] : memref<16x128xf32, #tpu.memory_space<vmem>>, vector<16x128xf32>
    %5 = arith.subf %3, %4 : vector<16x128xf32>
    %6 = arith.mulf %5, %5 : vector<16x128xf32>
    %cst = arith.constant 9.99999997E-7 : f32
    %7 = vector.broadcast %cst : f32 to vector<16x128xf32>
    %8 = arith.addf %6, %7 : vector<16x128xf32>
    %9 = math.sqrt %8 : vector<16x128xf32>
    %c0_4 = arith.constant 0 : index
    %c0_5 = arith.constant 0 : index
    %10 = vector.load %arg5[%c0_4, %c0_5] : memref<8x128xf32, #tpu.memory_space<vmem>>, vector<8x128xf32>
    %11 = vector.shape_cast %9 : vector<16x128xf32> to vector<2x8x128xf32>
    %cst_6 = arith.constant dense<0.000000e+00> : vector<8x128xf32>
    %12 = vector.multi_reduction <add>, %11, %cst_6 [0] : vector<2x8x128xf32> to vector<8x128xf32>
    %13 = arith.addf %10, %12 : vector<8x128xf32>
    %c0_7 = arith.constant 0 : index
    %c0_8 = arith.constant 0 : index
    %14 = vector.load %arg5[%c0_7, %c0_8] : memref<8x128xf32, #tpu.memory_space<vmem>>, vector<8x128xf32>
    tpu.vector_store %arg5[%c0_7, %c0_8], %13 {strides = array<i32>} : memref<8x128xf32, #tpu.memory_space<vmem>>, vector<8x128xf32>,
    %c0_i32_9 = arith.constant 0 : i32
    %15 = arith.cmpi eq, %arg1, %c0_i32_9 : i32
    %16 = arith.extui %15 : i1 to i32
    %c0_i32_10 = arith.constant 0 : i32
    %17 = arith.cmpi ne, %16, %c0_i32_10 : i32
    scf.if %17 {
      %c0_11 = arith.constant 0 : index
      %c0_12 = arith.constant 0 : index
      %18 = vector.load %arg5[%c0_11, %c0_12] : memref<8x128xf32, #tpu.memory_space<vmem>>, vector<8x128xf32>
      %19 = vector.shape_cast %18 : vector<8x128xf32> to vector<1x8x128xf32>
      %cst_13 = arith.constant dense<0.000000e+00> : vector<1xf32>
      %20 = vector.multi_reduction <add>, %19, %cst_13 [1, 2] : vector<1x8x128xf32> to vector<1xf32>
      %21 = vector.shape_cast %20 : vector<1xf32> to vector<1x1x1xf32>
      %22 = vector.extract %21[0, 0, 0] : f32 from vector<1x1x1xf32>
      %c0_14 = arith.constant 0 : index
      %c0_15 = arith.constant 0 : index
      %23 = memref.load %arg4[%c0_14, %c0_15] : memref<1x1xf32, #tpu.memory_space<smem>>
      memref.store %22, %arg4[%c0_14, %c0_15] : memref<1x1xf32, #tpu.memory_space<smem>>
    } else {
    }
    return
  }
  func.func @transform_0(%arg0: i32, %arg1: i32) -> (i32, i32) {
    %c1_i32 = arith.constant 1 : i32
    %0 = arith.muli %arg0, %c1_i32 : i32
    %1 = arith.addi %0, %arg1 : i32
    %c0_i32 = arith.constant 0 : i32
    %2 = arith.minsi %1, %c0_i32 : i32
    %c0_i32_0 = arith.constant 0 : i32
    %c0_i32_1 = arith.constant 0 : i32
    return %2, %c0_i32_0 : i32, i32
  }
  func.func @transform_1(%arg0: i32, %arg1: i32) -> (i32, i32) {
    %c1_i32 = arith.constant 1 : i32
    %0 = arith.muli %arg0, %c1_i32 : i32
    %1 = arith.addi %0, %arg1 : i32
    %c0_i32 = arith.constant 0 : i32
    %2 = arith.minsi %1, %c0_i32 : i32
    %c0_i32_0 = arith.constant 0 : i32
    %c0_i32_1 = arith.constant 0 : i32
    return %2, %c0_i32_0 : i32, i32
  }
  func.func @transform_2(%arg0: i32, %arg1: i32) -> (i32, i32) {
    %c0_i32 = arith.constant 0 : i32
    %c0_i32_0 = arith.constant 0 : i32
    return %arg0, %c0_i32 : i32, i32
  }
}

</mosaic_0001>

<llo_original>
// kernel: tpu_custom_call.1
$region0: #{tpu_custom_call.1}
  #allocation0 [shape = 'u32[]', space=smem, size = 0x4, offset = 0x4, fixed_abs, tag = 'smem constant byte address 0x4 - core index']
  #allocation1 [shape = 'u32[144,128]{1,0:T(1,128)}', space=vmem, size = 0x12000, scoped, tag = 'internal scratch']
  #allocation2 [shape = 'f32[8,128]{1,0:T(8,128)}', space=vmem, size = 0x1000, scoped, tag = 'scratch operand']
  %s0 = inlined_call_operand.hbm [shape: f32[16,128], index: 0, kind: input, shape index: {}]
  %s1 = inlined_call_operand.hbm [shape: f32[16,128], index: 1, kind: input, shape index: {}]
  %s2 = inlined_call_operand.hbm [shape: f32[1,1], index: 2, kind: output, shape index: {}]
  %s3 = sld [smem:[#allocation0]]
  $region34: #{tpu_custom_call.1} parent=0
    _
  %s5 = ssub.s32 1, %s3
  %s6 = scalar_select 0, %s5, %s3
  $region1: #{tpu_custom_call.1} parent=0
    #allocation3 [shape = 'u8[8192]{0}', space=vmem, size = 0x2000, scoped, tag = 'input window, operand 0, single buffered']
    #allocation4 [shape = 's32[1]{0}', space=sflag, size = 0x4, scoped, tag = 'scoped memory for tpu_custom_call.1']
    #allocation5 [shape = 's32[1]{0}', space=sflag, size = 0x4, scoped, tag = 'scoped memory for tpu_custom_call.1']
    #allocation6 [shape = 'u8[8192]{0}', space=vmem, size = 0x2000, scoped, tag = 'input window, operand 1, single buffered']
    #allocation7 [shape = 's32[1]{0}', space=sflag, size = 0x4, scoped, tag = 'scoped memory for tpu_custom_call.1']
    #allocation8 [shape = 'u8[512]{0}', space=smem, size = 0x200, scoped, tag = 'output window, operand 0, single buffered']
    %7 = vsyncpa [#allocation4], 0
    %8 = vsyncpa [#allocation7], 0
    %9 = vsyncpa [#allocation5], 0
    // Predicated region
    $region2: #{tpu_custom_call.1} parent=1 // pred_check
      _
    $region3: #{tpu_custom_call.1} parent=1 // pred_check_branch
      %11 = sbr.rel (0) target = $region5
    $region4: #{tpu_custom_call.1} parent=1 // pred_region
      %s12 = sadd.s32 0, 0
      %p13 = scmp.lt.s32.totalorder %s12, 0
      %s14 = scalar_select %p13, %s12, 0
      %s15 = smul.u32 2, %s14
      %s17 = ssub.s32 256, 256
      %18 = vsyncadd [#allocation4], %s17
      %s19 = smul.addr %s15, 128
      %s20 = scalar_lea.hbm %s0, %s19
      %s21 = sshll.u32 [#allocation3], 4
      %s22 = int_to_ptr.vmem [resolvable:$true] %s21
      %27 = dma.hbm_to_vmem [thread:$0]  %s20, 256, %s22, [#allocation4], 128, 128, 8
    $region5: #{tpu_custom_call.1} parent=1 // pred_fallthru
      _
    // Predicated region
    $region6: #{tpu_custom_call.1} parent=1 // pred_check
      _
    $region7: #{tpu_custom_call.1} parent=1 // pred_check_branch
      %29 = sbr.rel (0) target = $region9
    $region8: #{tpu_custom_call.1} parent=1 // pred_region
      %s30 = sadd.s32 0, 0
      %p31 = scmp.lt.s32.totalorder %s30, 0
      %s32 = scalar_select %p31, %s30, 0
      %s33 = smul.u32 2, %s32
      %s35 = ssub.s32 256, 256
      %36 = vsyncadd [#allocation7], %s35
      %s37 = smul.addr %s33, 128
      %s38 = scalar_lea.hbm %s1, %s37
      %s39 = sshll.u32 [#allocation6], 4
      %s40 = int_to_ptr.vmem [resolvable:$true] %s39
      %45 = dma.hbm_to_vmem [thread:$0]  %s38, 256, %s40, [#allocation7], 128, 128, 8
    $region9: #{tpu_custom_call.1} parent=1 // pred_fallthru
      _
    // Predicated region
    $region10: #{tpu_custom_call.1} parent=1 // pred_check
      _
    $region11: #{tpu_custom_call.1} parent=1 // pred_check_branch
      %47 = sbr.rel (0) target = $region13
    $region12: #{tpu_custom_call.1} parent=1 // pred_region
      %48 = dma.done [#allocation4], 256
    $region13: #{tpu_custom_call.1} parent=1 // pred_fallthru
      _
    // Predicated region
    $region14: #{tpu_custom_call.1} parent=1 // pred_check
      _
    $region15: #{tpu_custom_call.1} parent=1 // pred_check_branch
      %50 = sbr.rel (0) target = $region17
    $region16: #{tpu_custom_call.1} parent=1 // pred_region
      %51 = dma.done [#allocation7], 256
    $region17: #{tpu_custom_call.1} parent=1 // pred_fallthru
      _
    %s52 = sadd.s32 0, 0
    %p53 = scmp.lt.s32.totalorder %s52, 0
    %s54 = scalar_select %p53, %s52, 0
    %s55 = smul.u32 2, %s54
    %s56 = sadd.s32 0, 0
    %p57 = scmp.lt.s32.totalorder %s56, 0
    %s58 = scalar_select %p57, %s56, 0
    %s59 = smul.u32 2, %s58
    %p60 = scmp.eq.s32.totalorder 0, 0
    // Predicated region
    $region18: #{tpu_custom_call.1} parent=1 // pred_check
      %p61 = pneg %p60
    $region19: #{tpu_custom_call.1} parent=1 // pred_check_branch
      %63 = sbr.rel (%p61) target = $region21
    $region20: #{tpu_custom_call.1} parent=1 // pred_region
      %64 = vst [vmem:[#allocation2] sm:$0xff] 0.0
    $region21: #{tpu_custom_call.1} parent=1 // pred_fallthru
      _
    %v65 = vld [vmem:[#allocation3] sm:$0xff]
    %v66 = vld [vmem:[#allocation3 + $0x8] sm:$0xff]
    %v67 = vld [vmem:[#allocation6] sm:$0xff]
    %v68 = vld [vmem:[#allocation6 + $0x8] sm:$0xff]
    %v69 = vsub.f32 %v65, %v67
    %v70 = vsub.f32 %v66, %v68
    %v71 = vmul.f32 %v69, %v69
    %v72 = vmul.f32 %v70, %v70
    %v73 = vadd.f32 %v71, 1e-06
    %v74 = vadd.f32 %v72, 1e-06
    %v75 = vrsqrt.pop %v73
    %v76 = vmul.f32 %v73, %v75
    %vm77 = vcmp.eq.f32.partialorder %v73, inf
    %v78 = vsel %vm77, %v73, %v76
    %vm79 = vcmp.eq.f32.partialorder %v73, 0.0
    %v80 = vand.u32 %v73, 2147483648
    %v81 = vsel %vm79, %v80, %v78
    %v82 = vrsqrt.pop %v74
    %v83 = vmul.f32 %v74, %v82
    %vm84 = vcmp.eq.f32.partialorder %v74, inf
    %v85 = vsel %vm84, %v74, %v83
    %vm86 = vcmp.eq.f32.partialorder %v74, 0.0
    %v87 = vand.u32 %v74, 2147483648
    %v88 = vsel %vm86, %v87, %v85
    %v89 = vld [vmem:[#allocation2] sm:$0xff]
    %v90 = vadd.f32 %v81, %v88
    %v91 = vadd.f32 %v89, %v90
    %92 = vst [vmem:[#allocation2] sm:$0xff] %v91
    // Predicated region
    $region22: #{tpu_custom_call.1} parent=1 // pred_check
      %p93 = pneg %p60
    $region23: #{tpu_custom_call.1} parent=1 // pred_check_branch
      %95 = sbr.rel (%p93) target = $region25
    $region24: #{tpu_custom_call.1} parent=1 // pred_region
      %v96 = vld [vmem:[#allocation2] sm:$0xff]
      %97 = vadd.xlane.f32.xlu0 %v96
      %v98 = vpop.xlane.xlu0 %97
      %v99 = vrot.slane %v98, 4
      %v100 = vadd.f32 %v98, %v99
      %v101 = vrot.slane %v100, 2
      %v102 = vadd.f32 %v100, %v101
      %v103 = vrot.slane %v102, 1
      %v104 = vadd.f32 %v102, %v103
      %s105 = vtos %v104
      %s106 = scalar_lea.smem [#allocation8], 0
      %107 = sst [smem:[%s106]] %s105
    $region25: #{tpu_custom_call.1} parent=1 // pred_fallthru
      _
    // Predicated region
    $region26: #{tpu_custom_call.1} parent=1 // pred_check
      _
    $region27: #{tpu_custom_call.1} parent=1 // pred_check_branch
      %109 = sbr.rel (0) target = $region29
    $region28: #{tpu_custom_call.1} parent=1 // pred_region
      %s111 = ssub.s32 16, 16
      %112 = vsyncadd [#allocation5], %s111
      %115 = dma.smem_to_hbm [#allocation8], 16, %s2, [#allocation5]
    $region29: #{tpu_custom_call.1} parent=1 // pred_fallthru
      _
    // Predicated region
    $region30: #{tpu_custom_call.1} parent=1 // pred_check
      _
    $region31: #{tpu_custom_call.1} parent=1 // pred_check_branch
      %117 = sbr.rel (0) target = $region33
    $region32: #{tpu_custom_call.1} parent=1 // pred_region
      %118 = dma.done [#allocation5], 16
    $region33: #{tpu_custom_call.1} parent=1 // pred_fallthru
      _
    %119 = sfence
    %120 = vsyncpa [#allocation4], 1
    %121 = vsyncpa [#allocation7], 1
    %122 = vsyncpa [#allocation5], 1

</llo_original>
